<compile_context>
chip_gen: v6e
topology: v6e:2x2x1
jax: 0.10.0
libtpu: 0.0.40
codegen_flags: <defaults>
</compile_context>

<pallas_src>
import jax
import jax.numpy as jnp
from jax import lax
from jax.experimental import pallas as pl
from jax.experimental.pallas import tpu as pltpu


def _mlp_kernel(x_ref, w1_ref, b1_ref, w2_ref, b2_ref, w3_ref, b3_ref, o_ref):
    # x_ref: (Bt, F) f32 in native layout; in-kernel bf16 cast (free VPU op), then
    # contract dim 1 of both operands so h1 comes out lane-dense: (128, Bt).
    x_bf = x_ref[...].astype(jnp.bfloat16)
    h1 = lax.dot_general(w1_ref[...], x_bf,
                         dimension_numbers=(((1,), (1,)), ((), ())),
                         preferred_element_type=jnp.float32)          # (128, Bt)
    h1 = jnp.maximum(h1 + b1_ref[...], 0.0)

    # Dropout(p=0.2): identity in eval/inference mode.
    # TODO(synk): training-mode dropout (pltpu.prng_* mask + 1/(1-p) scaling) not implemented.

    # Layer 2: (64, 128) @ (128, Bt) -> (64, Bt), bf16 operands, f32 accumulation.
    h2 = jnp.dot(w2_ref[...], h1.astype(jnp.bfloat16),
                 preferred_element_type=jnp.float32)                  # (64, Bt)
    h2 = jnp.maximum(h2 + b2_ref[...], 0.0)

    # Layer 3 (64 -> 1): VPU multiply + XLU cross-sublane reduce keeps the MXU free
    # and the (1, Bt) result lane-dense.  b3 is an SMEM scalar.
    logits = jnp.sum(h2 * w3_ref[...], axis=0, keepdims=True) + b3_ref[0, 0]
    o_ref[...] = jax.nn.sigmoid(logits).astype(o_ref.dtype)


def prepare_params(params):
    """One-time conversion of torch-layout params (W:[out,in], b:[out]) into
    kernel-ready layouts/dtypes.  Hoisted out of the forward path so repeated
    calls don't pay the tiny cast/reshape launches."""
    w1, b1, w2, b2, w3, b3 = (params[k] for k in ("w1", "b1", "w2", "b2", "w3", "b3"))
    H1, H2 = w1.shape[0], w2.shape[0]
    return {
        "w1": w1.astype(jnp.bfloat16),                 # (128, F)
        "b1": b1.reshape(H1, 1).astype(jnp.float32),   # (128, 1) lane-broadcast column
        "w2": w2.astype(jnp.bfloat16),                 # (64, 128)
        "b2": b2.reshape(H2, 1).astype(jnp.float32),   # (64, 1)
        "w3": w3.reshape(H2, 1).astype(jnp.float32),   # (64, 1) used on the VPU
        "b3": b3.reshape(1, 1).astype(jnp.float32),    # SMEM scalar
    }


def _pick_batch_tile(B):
    # ~B/2 rounded up to a multiple of 128 (>=2 grid steps for v7x dual-TC sharding
    # when B >= 256), capped at 4096 to bound padding waste and the VMEM working set.
    return int(min(4096, max(128, 128 * pl.cdiv(B, 256))))


def questionnaire_nn_forward(x, kernel_params, *, batch_tile=None):
    """x: [B, F] float32 (native layout); kernel_params from prepare_params().

    Returns [B, 1] float32 sigmoid probabilities."""
    kp = kernel_params
    B, F = x.shape
    if batch_tile is None:
        batch_tile = _pick_batch_tile(B)
    n_tiles = pl.cdiv(B, batch_tile)
    Bp = n_tiles * batch_tile
    if Bp != B:                                    # pad batch rows only when needed
        x = jnp.pad(x, ((0, Bp - B), (0, 0)))

    # Grid-invariant operands (~12 KB total) stay resident in VMEM; double-buffer
    # waste at this size is negligible, so default pipeline_mode is kept for portability.
    const = lambda shape: pl.BlockSpec(shape, lambda i: (0, 0))

    out_t = pl.pallas_call(
        _mlp_kernel,
        out_shape=jax.ShapeDtypeStruct((1, Bp), jnp.float32),
        grid_spec=pltpu.PrefetchScalarGridSpec(
            num_scalar_prefetch=0,
            grid=(n_tiles,),
            in_specs=[
                pl.BlockSpec((batch_tile, F), lambda i: (i, 0)),   # x fed directly, [B,F] f32
                const(kp["w1"].shape),
                const(kp["b1"].shape),
                const(kp["w2"].shape),
                const(kp["b2"].shape),
                const(kp["w3"].shape),
                pl.BlockSpec(memory_space=pltpu.MemorySpace.SMEM),  # b3 scalar in SMEM
            ],
            out_specs=pl.BlockSpec((1, batch_tile), lambda i: (0, i)),  # lane-dense output
        ),
        compiler_params=pltpu.CompilerParams(
            dimension_semantics=("parallel",),   # shards batch tiles across TCs on v7x
        ),
    )(x, kp["w1"], kp["b1"], kp["w2"], kp["b2"], kp["w3"], kp["b3"])

    return out_t[0, :B].reshape(B, 1)


def init_params(key, in_features):
    """torch.nn.Linear-style init/layout: W [out, in], b [out], U[-1/sqrt(fan_in), +]."""
    def linear_init(k, fan_in, fan_out):
        kw, kb = jax.random.split(k)
        bound = 1.0 / jnp.sqrt(jnp.float32(fan_in))
        w = jax.random.uniform(kw, (fan_out, fan_in), jnp.float32, -bound, bound)
        b = jax.random.uniform(kb, (fan_out,), jnp.float32, -bound, bound)
        return w, b

    k1, k2, k3 = jax.random.split(key, 3)
    w1, b1 = linear_init(k1, in_features, 128)
    w2, b2 = linear_init(k2, 128, 64)
    w3, b3 = linear_init(k3, 64, 1)
    return {"w1": w1, "b1": b1, "w2": w2, "b2": b2, "w3": w3, "b3": b3}


def _reference_forward_f32(x, p):
    h1 = jnp.maximum(x @ p["w1"].T + p["b1"], 0.0)
    h2 = jnp.maximum(h1 @ p["w2"].T + p["b2"], 0.0)
    return jax.nn.sigmoid(h2 @ p["w3"].T + p["b3"])


def _reference_forward_bf16(x, p):
    """Mirrors the kernel's precision: bf16 matmul operands, f32 accumulation."""
    h1 = jnp.dot(x.astype(jnp.bfloat16), p["w1"].T.astype(jnp.bfloat16),
                 preferred_element_type=jnp.float32)
    h1 = jnp.maximum(h1 + p["b1"], 0.0)
    h2 = jnp.dot(h1.astype(jnp.bfloat16), p["w2"].T.astype(jnp.bfloat16),
                 preferred_element_type=jnp.float32)
    h2 = jnp.maximum(h2 + p["b2"], 0.0)
    logits = h2 @ p["w3"].T.astype(jnp.float32) + p["b3"]
    return jax.nn.sigmoid(logits)


if __name__ == "__main__":
    key = jax.random.PRNGKey(0)
    k_x, k_p = jax.random.split(key)

    # StandardScaler output ~ zero-mean/unit-var, so standard normal inputs are representative.
    batch, in_features = 512, 32
    x = jax.random.normal(k_x, (batch, in_features), jnp.float32)
    params = init_params(k_p, in_features)
    kernel_params = prepare_params(params)          # one-time prep, hoisted out of forward

    # B=512 -> adaptive batch_tile=256, 2 grid steps (keeps both v7x TCs busy).
    fwd = jax.jit(lambda xx: questionnaire_nn_forward(xx, kernel_params))
    out = jax.block_until_ready(fwd(x))

    assert out.shape == (batch, 1), out.shape

    ref_bf16 = _reference_forward_bf16(x, params)
    err_bf16 = float(jnp.max(jnp.abs(out - ref_bf16)))
    assert err_bf16 < 2e-3, f"mismatch vs bf16-matched reference: {err_bf16}"

    ref_f32 = _reference_forward_f32(x, params)
    err_f32 = float(jnp.max(jnp.abs(out - ref_f32)))
    assert err_f32 < 3e-2, f"mismatch vs f32 reference: {err_f32}"

    print("KERNEL_OK")
</pallas_src>

<mosaic_0001>
module attributes {stable_mosaic.version = 11 : i64} {
  func.func @_mlp_kernel(%arg0: i32, %arg1: memref<256x32xf32, #tpu.memory_space<vmem>>, %arg2: memref<128x32xbf16, #tpu.memory_space<vmem>>, %arg3: memref<128x1xf32, #tpu.memory_space<vmem>>, %arg4: memref<64x128xbf16, #tpu.memory_space<vmem>>, %arg5: memref<64x1xf32, #tpu.memory_space<vmem>>, %arg6: memref<64x1xf32, #tpu.memory_space<vmem>>, %arg7: memref<1x1xf32, #tpu.memory_space<smem>>, %arg8: memref<1x256xf32, #tpu.memory_space<vmem>>) attributes {dimension_semantics = [#tpu.dimension_semantics<parallel>], iteration_bounds = array<i64: 2>, scalar_prefetch = 0 : i64, scratch_operands = 0 : i64, tpu.core_type = #tpu.core_type<tc>, window_params = [{transform_indices = @transform_0, window_bounds = array<i64: 256, 32>}, {pipeline_mode = #tpu.pipeline_mode<synchronous>, transform_indices = @transform_1, window_bounds = array<i64: 128, 32>}, {pipeline_mode = #tpu.pipeline_mode<synchronous>, transform_indices = @transform_2, window_bounds = array<i64: 128, 1>}, {pipeline_mode = #tpu.pipeline_mode<synchronous>, transform_indices = @transform_3, window_bounds = array<i64: 64, 128>}, {pipeline_mode = #tpu.pipeline_mode<synchronous>, transform_indices = @transform_4, window_bounds = array<i64: 64, 1>}, {pipeline_mode = #tpu.pipeline_mode<synchronous>, transform_indices = @transform_5, window_bounds = array<i64: 64, 1>}, {transform_indices = @transform_6, window_bounds = array<i64: 1, 1>}, {transform_indices = @transform_7, window_bounds = array<i64: 1, 256>}]} {
    %c0 = arith.constant 0 : index
    %c0_0 = arith.constant 0 : index
    %0 = vector.load %arg1[%c0, %c0_0] : memref<256x32xf32, #tpu.memory_space<vmem>>, vector<256x32xf32>
    %1 = arith.truncf %0 : vector<256x32xf32> to vector<256x32xbf16>
    %c0_1 = arith.constant 0 : index
    %c0_2 = arith.constant 0 : index
    %2 = vector.load %arg2[%c0_1, %c0_2] : memref<128x32xbf16, #tpu.memory_space<vmem>>, vector<128x32xbf16>
    %cst = arith.constant dense<0.000000e+00> : vector<128x256xf32>
    %3 = tpu.matmul %2, %1, %cst {dimension_numbers = #tpu.dot_dimension_numbers<[1], [1], [0], [0], [0, 0, 1, 0], [], []>} : vector<128x32xbf16>, vector<256x32xbf16>, vector<128x256xf32> -> vector<128x256xf32>
    %c0_3 = arith.constant 0 : index
    %c0_4 = arith.constant 0 : index
    %4 = vector.load %arg3[%c0_3, %c0_4] : memref<128x1xf32, #tpu.memory_space<vmem>>, vector<128x1xf32>
    %5 = vector.broadcast %4 : vector<128x1xf32> to vector<128x256xf32>
    %6 = arith.addf %3, %5 : vector<128x256xf32>
    %cst_5 = arith.constant 0.000000e+00 : f32
    %7 = vector.broadcast %cst_5 : f32 to vector<128x256xf32>
    %8 = arith.maximumf %6, %7 : vector<128x256xf32>
    %c0_6 = arith.constant 0 : index
    %c0_7 = arith.constant 0 : index
    %9 = vector.load %arg4[%c0_6, %c0_7] : memref<64x128xbf16, #tpu.memory_space<vmem>>, vector<64x128xbf16>
    %10 = arith.truncf %8 : vector<128x256xf32> to vector<128x256xbf16>
    %cst_8 = arith.constant dense<0.000000e+00> : vector<64x256xf32>
    %11 = tpu.matmul %9, %10, %cst_8 {dimension_numbers = #tpu.dot_dimension_numbers<[1], [0], [0], [1], [0, 0, 1, 1], [], []>} : vector<64x128xbf16>, vector<128x256xbf16>, vector<64x256xf32> -> vector<64x256xf32>
    %c0_9 = arith.constant 0 : index
    %c0_10 = arith.constant 0 : index
    %12 = vector.load %arg5[%c0_9, %c0_10] : memref<64x1xf32, #tpu.memory_space<vmem>>, vector<64x1xf32>
    %13 = vector.broadcast %12 : vector<64x1xf32> to vector<64x256xf32>
    %14 = arith.addf %11, %13 : vector<64x256xf32>
    %cst_11 = arith.constant 0.000000e+00 : f32
    %15 = vector.broadcast %cst_11 : f32 to vector<64x256xf32>
    %16 = arith.maximumf %14, %15 : vector<64x256xf32>
    %c0_12 = arith.constant 0 : index
    %c0_13 = arith.constant 0 : index
    %17 = vector.load %arg6[%c0_12, %c0_13] : memref<64x1xf32, #tpu.memory_space<vmem>>, vector<64x1xf32>
    %18 = vector.broadcast %17 : vector<64x1xf32> to vector<64x256xf32>
    %19 = arith.mulf %16, %18 : vector<64x256xf32>
    %cst_14 = arith.constant dense<0.000000e+00> : vector<256xf32>
    %20 = vector.multi_reduction <add>, %19, %cst_14 [0] : vector<64x256xf32> to vector<256xf32>
    %21 = vector.shape_cast %20 : vector<256xf32> to vector<1x256xf32>
    %c0_15 = arith.constant 0 : index
    %c0_16 = arith.constant 0 : index
    %22 = memref.load %arg7[%c0_15, %c0_16] : memref<1x1xf32, #tpu.memory_space<smem>>
    %23 = vector.broadcast %22 : f32 to vector<1x256xf32>
    %24 = arith.addf %21, %23 : vector<1x256xf32>
    %25 = arith.negf %24 : vector<1x256xf32>
    %26 = math.exp %25 : vector<1x256xf32>
    %cst_17 = arith.constant 1.000000e+00 : f32
    %27 = vector.broadcast %cst_17 : f32 to vector<1x256xf32>
    %28 = arith.addf %27, %26 : vector<1x256xf32>
    %29 = arith.divf %27, %28 : vector<1x256xf32>
    %c0_18 = arith.constant 0 : index
    %c0_19 = arith.constant 0 : index
    %30 = vector.load %arg8[%c0_18, %c0_19] : memref<1x256xf32, #tpu.memory_space<vmem>>, vector<1x256xf32>
    tpu.vector_store %arg8[%c0_18, %c0_19], %29 {strides = array<i32>} : memref<1x256xf32, #tpu.memory_space<vmem>>, vector<1x256xf32>,
    return
  }
  func.func @transform_0(%arg0: i32) -> (i32, i32) {
    %c0_i32 = arith.constant 0 : i32
    %c0_i32_0 = arith.constant 0 : i32
    return %arg0, %c0_i32 : i32, i32
  }
  func.func @transform_1(%arg0: i32) -> (i32, i32) {
    %c0_i32 = arith.constant 0 : i32
    %c0_i32_0 = arith.constant 0 : i32
    %c0_i32_1 = arith.constant 0 : i32
    return %c0_i32, %c0_i32_0 : i32, i32
  }
  func.func @transform_2(%arg0: i32) -> (i32, i32) {
    %c0_i32 = arith.constant 0 : i32
    %c0_i32_0 = arith.constant 0 : i32
    %c0_i32_1 = arith.constant 0 : i32
    return %c0_i32, %c0_i32_0 : i32, i32
  }
  func.func @transform_3(%arg0: i32) -> (i32, i32) {
    %c0_i32 = arith.constant 0 : i32
    %c0_i32_0 = arith.constant 0 : i32
    %c0_i32_1 = arith.constant 0 : i32
    return %c0_i32, %c0_i32_0 : i32, i32
  }
  func.func @transform_4(%arg0: i32) -> (i32, i32) {
    %c0_i32 = arith.constant 0 : i32
    %c0_i32_0 = arith.constant 0 : i32
    %c0_i32_1 = arith.constant 0 : i32
    return %c0_i32, %c0_i32_0 : i32, i32
  }
  func.func @transform_5(%arg0: i32) -> (i32, i32) {
    %c0_i32 = arith.constant 0 : i32
    %c0_i32_0 = arith.constant 0 : i32
    %c0_i32_1 = arith.constant 0 : i32
    return %c0_i32, %c0_i32_0 : i32, i32
  }
  func.func @transform_6(%arg0: i32) -> (i32, i32) {
    %c0_i32 = arith.constant 0 : i32
    %c0_i32_0 = arith.constant 0 : i32
    %c0_i32_1 = arith.constant 0 : i32
    return %c0_i32, %c0_i32_0 : i32, i32
  }
  func.func @transform_7(%arg0: i32) -> (i32, i32) {
    %c0_i32 = arith.constant 0 : i32
    %c0_i32_0 = arith.constant 0 : i32
    return %c0_i32, %arg0 : i32, i32
  }
}

</mosaic_0001>

<llo_original>
// kernel: _lambda_.1
$region0: #{_lambda_.1}
  #allocation0 [shape = 'u32[]', space=smem, size = 0x4, offset = 0x4, fixed_abs, tag = 'smem constant byte address 0x4 - core index']
  #allocation1 [shape = 'u32[144,128]{1,0:T(1,128)}', space=vmem, size = 0x12000, scoped, tag = 'internal scratch']
  #allocation2 [shape = 'f32[1,1]{1,0:T(1,128)S(6)}', space=smem, size = 0x200, scoped, tag = 'scoped memory for _lambda_.1']
  %s0 = inlined_call_operand.vmem [shape: f32[512,32], index: 0, kind: input, shape index: {}]
  %s1 = inlined_call_operand.vmem [shape: bf16[128,32], index: 1, kind: input, shape index: {}]
  %s2 = inlined_call_operand.vmem [shape: f32[128,1], index: 2, kind: input, shape index: {}]
  %s3 = inlined_call_operand.vmem [shape: bf16[64,128], index: 3, kind: input, shape index: {}]
  %s4 = inlined_call_operand.vmem [shape: f32[64,1], index: 4, kind: input, shape index: {}]
  %s5 = inlined_call_operand.vmem [shape: f32[64,1], index: 5, kind: input, shape index: {}]
  %s6 = inlined_call_operand.<no memory space> [shape: f32[1,1], index: 6, kind: input, shape index: {}]
  %s7 = inlined_call_operand.hbm [shape: f32[1,512], index: 7, kind: output, shape index: {}]
  %s8 = sld [smem:[#allocation0]]
  $region61: #{_lambda_.1} parent=0
    _
  %s10 = ssub.s32 1, %s8
  %s11 = scalar_select 0, %s10, %s8
  %12 = sst [smem:[#allocation2]] %s6
  $region1: #{_lambda_.1} parent=0
    #allocation3 [shape = 'u8[2048]{0}', space=vmem, size = 0x800, scoped, tag = 'output window, operand 0']
    #allocation4 [shape = 's32[2]{0}', space=sflag, size = 0x8, scoped, tag = 'scoped memory for _lambda_.1']
    %13 = vsyncpa [#allocation4], 0
    %s14 = scalar_lea.sflag [#allocation4], 1
    %15 = vsyncpa %s14, 0
    loop: start=0, step=1, limit=4
    $region2: #{_lambda_.1} parent=1 // loop_pre_header
      _
    $region3: #{_lambda_.1} parent=1 // loop_header
      %s17 = sphi 0, %s21
      %p18 = scmp.ge.s32.totalorder %s17, 4
      %s27 = sphi 0, %s29
      %s30 = sphi 0, %s27
      %s31 = sphi 0, %s30
      %s47 = sphi 0, %s31
      %s51 = sphi 0, %s51
      %s53 = sphi 0, %s51
      %s54 = sphi 0, %s53
      %s68 = sphi 0, %s54
      %s72 = sphi 0, %s72
      %s74 = sphi 0, %s72
      %s75 = sphi 0, %s74
      %s89 = sphi 0, %s75
      %s93 = sphi 0, %s93
      %s95 = sphi 0, %s93
      %s96 = sphi 0, %s95
      %s110 = sphi 0, %s96
      %s114 = sphi 0, %s114
      %s116 = sphi 0, %s114
      %s117 = sphi 0, %s116
      %s131 = sphi 0, %s117
      %s135 = sphi 0, %s135
      %s137 = sphi 0, %s135
      %s138 = sphi 0, %s137
      %s152 = sphi 0, %s138
      %s156 = sphi 0, %s156
      %s158 = sphi 0, %s156
      %s159 = sphi 0, %s158
      %s173 = sphi 0, %s159
      %s179 = sphi 0, %s181
      %s182 = sphi 0, %s179
      %s183 = sphi 0, %s182
      %s199 = sphi 0, %s183
    $region4: #{_lambda_.1} parent=1 // loop_header_branch
      %20 = sbr.rel (%p18) target = $region8
    $region5: #{_lambda_.1} parent=1 // loop_body
      %s22 = ssub.s32 %s17, 1
      %s23 = ssub.s32 %s17, 2
      %s24 = sadd.s32 %s17, 1
      %s25 = ssub.s32 %s17, %s24
      %p26 = scmp.eq.s32.totalorder %s25, 0
      %s28 = sadd.s32 %s27, 1
      %s29 = scalar_select %p26, %s27, %s28
      %p32 = pneg %p26
      %p33 = scmp.eq.s32.totalorder %s17, 1
      %p34 = por %p32, %p33
      %p35 = scmp.ne.s32.totalorder %s27, %s30
      %p36 = scmp.eq.s32.totalorder %s17, 0
      %p37 = por %p35, %p36
      %p38 = scmp.ne.s32.totalorder %s27, %s30
      %p39 = scmp.eq.s32.totalorder %s22, 1
      %p40 = por %p38, %p39
      %p41 = scmp.ne.s32.totalorder %s30, %s31
      %p42 = scmp.eq.s32.totalorder %s22, 0
      %p43 = por %p41, %p42
      %p44 = scmp.ne.s32.totalorder %s30, %s31
      %p45 = scmp.eq.s32.totalorder %s23, 1
      %p46 = por %p44, %p45
      %p48 = scmp.ne.s32.totalorder %s31, %s47
      %p49 = scmp.eq.s32.totalorder %s23, 0
      %p50 = por %p48, %p49
      %s52 = sadd.s32 %s51, 1
      %p55 = scmp.eq.s32.totalorder %s17, 1
      %p56 = scmp.ne.s32.totalorder %s51, %s53
      %p57 = scmp.eq.s32.totalorder %s17, 0
      %p58 = por %p56, %p57
      %p59 = scmp.ne.s32.totalorder %s51, %s53
      %p60 = scmp.eq.s32.totalorder %s22, 1
      %p61 = por %p59, %p60
      %p62 = scmp.ne.s32.totalorder %s53, %s54
      %p63 = scmp.eq.s32.totalorder %s22, 0
      %p64 = por %p62, %p63
      %p65 = scmp.ne.s32.totalorder %s53, %s54
      %p66 = scmp.eq.s32.totalorder %s23, 1
      %p67 = por %p65, %p66
      %p69 = scmp.ne.s32.totalorder %s54, %s68
      %p70 = scmp.eq.s32.totalorder %s23, 0
      %p71 = por %p69, %p70
      %s73 = sadd.s32 %s72, 1
      %p76 = scmp.eq.s32.totalorder %s17, 1
      %p77 = scmp.ne.s32.totalorder %s72, %s74
      %p78 = scmp.eq.s32.totalorder %s17, 0
      %p79 = por %p77, %p78
      %p80 = scmp.ne.s32.totalorder %s72, %s74
      %p81 = scmp.eq.s32.totalorder %s22, 1
      %p82 = por %p80, %p81
      %p83 = scmp.ne.s32.totalorder %s74, %s75
      %p84 = scmp.eq.s32.totalorder %s22, 0
      %p85 = por %p83, %p84
      %p86 = scmp.ne.s32.totalorder %s74, %s75
      %p87 = scmp.eq.s32.totalorder %s23, 1
      %p88 = por %p86, %p87
      %p90 = scmp.ne.s32.totalorder %s75, %s89
      %p91 = scmp.eq.s32.totalorder %s23, 0
      %p92 = por %p90, %p91
      %s94 = sadd.s32 %s93, 1
      %p97 = scmp.eq.s32.totalorder %s17, 1
      %p98 = scmp.ne.s32.totalorder %s93, %s95
      %p99 = scmp.eq.s32.totalorder %s17, 0
      %p100 = por %p98, %p99
      %p101 = scmp.ne.s32.totalorder %s93, %s95
      %p102 = scmp.eq.s32.totalorder %s22, 1
      %p103 = por %p101, %p102
      %p104 = scmp.ne.s32.totalorder %s95, %s96
      %p105 = scmp.eq.s32.totalorder %s22, 0
      %p106 = por %p104, %p105
      %p107 = scmp.ne.s32.totalorder %s95, %s96
      %p108 = scmp.eq.s32.totalorder %s23, 1
      %p109 = por %p107, %p108
      %p111 = scmp.ne.s32.totalorder %s96, %s110
      %p112 = scmp.eq.s32.totalorder %s23, 0
      %p113 = por %p111, %p112
      %s115 = sadd.s32 %s114, 1
      %p118 = scmp.eq.s32.totalorder %s17, 1
      %p119 = scmp.ne.s32.totalorder %s114, %s116
      %p120 = scmp.eq.s32.totalorder %s17, 0
      %p121 = por %p119, %p120
      %p122 = scmp.ne.s32.totalorder %s114, %s116
      %p123 = scmp.eq.s32.totalorder %s22, 1
      %p124 = por %p122, %p123
      %p125 = scmp.ne.s32.totalorder %s116, %s117
      %p126 = scmp.eq.s32.totalorder %s22, 0
      %p127 = por %p125, %p126
      %p128 = scmp.ne.s32.totalorder %s116, %s117
      %p129 = scmp.eq.s32.totalorder %s23, 1
      %p130 = por %p128, %p129
      %p132 = scmp.ne.s32.totalorder %s117, %s131
      %p133 = scmp.eq.s32.totalorder %s23, 0
      %p134 = por %p132, %p133
      %s136 = sadd.s32 %s135, 1
      %p139 = scmp.eq.s32.totalorder %s17, 1
      %p140 = scmp.ne.s32.totalorder %s135, %s137
      %p141 = scmp.eq.s32.totalorder %s17, 0
      %p142 = por %p140, %p141
      %p143 = scmp.ne.s32.totalorder %s135, %s137
      %p144 = scmp.eq.s32.totalorder %s22, 1
      %p145 = por %p143, %p144
      %p146 = scmp.ne.s32.totalorder %s137, %s138
      %p147 = scmp.eq.s32.totalorder %s22, 0
      %p148 = por %p146, %p147
      %p149 = scmp.ne.s32.totalorder %s137, %s138
      %p150 = scmp.eq.s32.totalorder %s23, 1
      %p151 = por %p149, %p150
      %p153 = scmp.ne.s32.totalorder %s138, %s152
      %p154 = scmp.eq.s32.totalorder %s23, 0
      %p155 = por %p153, %p154
      %s157 = sadd.s32 %s156, 1
      %p160 = scmp.eq.s32.totalorder %s17, 1
      %p161 = scmp.ne.s32.totalorder %s156, %s158
      %p162 = scmp.eq.s32.totalorder %s17, 0
      %p163 = por %p161, %p162
      %p164 = scmp.ne.s32.totalorder %s156, %s158
      %p165 = scmp.eq.s32.totalorder %s22, 1
      %p166 = por %p164, %p165
      %p167 = scmp.ne.s32.totalorder %s158, %s159
      %p168 = scmp.eq.s32.totalorder %s22, 0
      %p169 = por %p167, %p168
      %p170 = scmp.ne.s32.totalorder %s158, %s159
      %p171 = scmp.eq.s32.totalorder %s23, 1
      %p172 = por %p170, %p171
      %p174 = scmp.ne.s32.totalorder %s159, %s173
      %p175 = scmp.eq.s32.totalorder %s23, 0
      %p176 = por %p174, %p175
      %s177 = ssub.s32 %s17, %s24
      %p178 = scmp.eq.s32.totalorder %s177, 0
      %s180 = sadd.s32 %s179, 1
      %s181 = scalar_select %p178, %s179, %s180
      %p184 = pneg %p178
      %p185 = scmp.eq.s32.totalorder %s17, 1
      %p186 = por %p184, %p185
      %p187 = scmp.ne.s32.totalorder %s179, %s182
      %p188 = scmp.eq.s32.totalorder %s17, 0
      %p189 = por %p187, %p188
      %p190 = scmp.ne.s32.totalorder %s179, %s182
      %p191 = scmp.eq.s32.totalorder %s22, 1
      %p192 = por %p190, %p191
      %p193 = scmp.ne.s32.totalorder %s182, %s183
      %p194 = scmp.eq.s32.totalorder %s22, 0
      %p195 = por %p193, %p194
      %p196 = scmp.ne.s32.totalorder %s182, %s183
      %p197 = scmp.eq.s32.totalorder %s23, 1
      %p198 = por %p196, %p197
      %p200 = scmp.ne.s32.totalorder %s183, %s199
      %p201 = scmp.eq.s32.totalorder %s23, 0
      %p202 = por %p200, %p201
      %p203 = scmp.le.s32.totalorder 1, %s17
      %p204 = scmp.lt.s32.totalorder %s17, 3
      %p205 = pnand %p203, %p204
      %p206 = pneg %p205
      // Predicated region
      $region9: #{_lambda_.1} parent=5 // pred_check
        _
      $region10: #{_lambda_.1} parent=5 // pred_check_branch
        %208 = sbr.rel (%p205) target = $region12
      $region11: #{_lambda_.1} parent=5 // pred_region
        %s209 = ssub.s32 %s17, 1
        // Predicated region
        $region13: #{_lambda_.1} parent=11 // pred_check
          %p210 = pneg %p64
        $region14: #{_lambda_.1} parent=11 // pred_check_branch
          %212 = sbr.rel (%p210) target = $region16
        $region15: #{_lambda_.1} parent=11 // pred_region
          _
        $region16: #{_lambda_.1} parent=11 // pred_fallthru
          _
        // Predicated region
        $region17: #{_lambda_.1} parent=11 // pred_check
          %p213 = pneg %p85
        $region18: #{_lambda_.1} parent=11 // pred_check_branch
          %215 = sbr.rel (%p213) target = $region20
        $region19: #{_lambda_.1} parent=11 // pred_region
          _
        $region20: #{_lambda_.1} parent=11 // pred_fallthru
          _
        // Predicated region
        $region21: #{_lambda_.1} parent=11 // pred_check
          %p216 = pneg %p106
        $region22: #{_lambda_.1} parent=11 // pred_check_branch
          %218 = sbr.rel (%p216) target = $region24
        $region23: #{_lambda_.1} parent=11 // pred_region
          _
        $region24: #{_lambda_.1} parent=11 // pred_fallthru
          _
        // Predicated region
        $region25: #{_lambda_.1} parent=11 // pred_check
          %p219 = pneg %p127
        $region26: #{_lambda_.1} parent=11 // pred_check_branch
          %221 = sbr.rel (%p219) target = $region28
        $region27: #{_lambda_.1} parent=11 // pred_region
          _
        $region28: #{_lambda_.1} parent=11 // pred_fallthru
          _
        // Predicated region
        $region29: #{_lambda_.1} parent=11 // pred_check
          %p222 = pneg %p148
        $region30: #{_lambda_.1} parent=11 // pred_check_branch
          %224 = sbr.rel (%p222) target = $region32
        $region31: #{_lambda_.1} parent=11 // pred_region
          _
        $region32: #{_lambda_.1} parent=11 // pred_fallthru
          _
        // Predicated region
        $region33: #{_lambda_.1} parent=11 // pred_check
          %p225 = pneg %p169
        $region34: #{_lambda_.1} parent=11 // pred_check_branch
          %227 = sbr.rel (%p225) target = $region36
        $region35: #{_lambda_.1} parent=11 // pred_region
          _
        $region36: #{_lambda_.1} parent=11 // pred_fallthru
          _
      $region12: #{_lambda_.1} parent=5 // pred_fallthru
        _
      %p228 = scmp.lt.s32.totalorder %s17, 2
      // Predicated region
      $region37: #{_lambda_.1} parent=5 // pred_check
        %p229 = pneg %p228
      $region38: #{_lambda_.1} parent=5 // pred_check_branch
        %231 = sbr.rel (%p229) target = $region40
      $region39: #{_lambda_.1} parent=5 // pred_region
        // Predicated region
        $region41: #{_lambda_.1} parent=39 // pred_check
          %p232 = pneg %p37
        $region42: #{_lambda_.1} parent=39 // pred_check_branch
          %234 = sbr.rel (%p232) target = $region44
        $region43: #{_lambda_.1} parent=39 // pred_region
          %s235 = smul.u32 32, %s17
          %p236 = scmp.lt.s32.totalorder %s235, 63
          %s237 = scalar_select %p236, %s235, 63
          %s238 = smul.addr %s237, 8
          %s239 = scalar_lea.vmem %s0, %s238
          %s240 = smul.u32 32, %s17
        $region44: #{_lambda_.1} parent=39 // pred_fallthru
          _
      $region40: #{_lambda_.1} parent=5 // pred_fallthru
        _
      %p241 = scmp.le.s32.totalorder 1, %s17
      %p242 = scmp.lt.s32.totalorder %s17, 3
      %p243 = pnand %p241, %p242
      %p244 = pneg %p243
      // Predicated region
      $region45: #{_lambda_.1} parent=5 // pred_check
        _
      $region46: #{_lambda_.1} parent=5 // pred_check_branch
        %246 = sbr.rel (%p243) target = $region48
      $region47: #{_lambda_.1} parent=5 // pred_region
        %s247 = ssub.s32 %s17, 1
        %s248 = smul.u32 32, %s22
        %p249 = scmp.lt.s32.totalorder %s248, 63
        %s250 = scalar_select %p249, %s248, 63
        %s251 = smul.addr %s250, 8
        %s252 = scalar_lea.vmem %s0, %s251
        %p253 = pneg %p43
        %p254 = pneg %p40
        %p255 = pneg %p64
        %p256 = pneg %p61
        %p257 = pneg %p85
        %p258 = pneg %p82
        %p259 = pneg %p106
        %p260 = pneg %p103
        %p261 = pneg %p127
        %p262 = pneg %p124
        %p263 = pneg %p148
        %p264 = pneg %p145
        %p265 = pneg %p169
        %p266 = pneg %p166
        %p267 = pneg %p195
        %p268 = pneg %p192
        %s269 = sand.u32 %s182, 1
        %s270 = scalar_lea.sflag [#allocation4], %s269
        %s271 = sand.u32 %s182, 1
        %s272 = smul.addr %s271, 2
        %s273 = scalar_lea.vmem [#allocation3], %s272
        %s274 = smul.u32 32, %s22
        %p275 = scmp.lt.s32.totalorder %s274, 63
        %s276 = scalar_select %p275, %s274, 63
        %s277 = smul.addr %s276, 8
        %s278 = scalar_lea.vmem %s0, %s277
        %s279 = smul.u32 32, %s22
        %s280 = smul.u32 2, %s22
        %v282 = vld [vmem:[%s278] sm:$0xff]
        %v283 = vld [vmem:[%s278 + $0x8] sm:$0xff]
        %v284 = vld [vmem:[%s278 + $0x10] sm:$0xff]
        %v285 = vld [vmem:[%s278 + $0x18] sm:$0xff]
        %v286 = vld [vmem:[%s278 + $0x20] sm:$0xff]
        %v287 = vld [vmem:[%s278 + $0x28] sm:$0xff]
        %v288 = vld [vmem:[%s278 + $0x30] sm:$0xff]
        %v289 = vld [vmem:[%s278 + $0x38] sm:$0xff]
        %v290 = vld [vmem:[%s278 + $0x40] sm:$0xff]
        %v291 = vld [vmem:[%s278 + $0x48] sm:$0xff]
        %v292 = vld [vmem:[%s278 + $0x50] sm:$0xff]
        %v293 = vld [vmem:[%s278 + $0x58] sm:$0xff]
        %v294 = vld [vmem:[%s278 + $0x60] sm:$0xff]
        %v295 = vld [vmem:[%s278 + $0x68] sm:$0xff]
        %v296 = vld [vmem:[%s278 + $0x70] sm:$0xff]
        %v297 = vld [vmem:[%s278 + $0x78] sm:$0xff]
        %v298 = vld [vmem:[%s278 + $0x80] sm:$0xff]
        %v299 = vld [vmem:[%s278 + $0x88] sm:$0xff]
        %v300 = vld [vmem:[%s278 + $0x90] sm:$0xff]
        %v301 = vld [vmem:[%s278 + $0x98] sm:$0xff]
        %v302 = vld [vmem:[%s278 + $0xa0] sm:$0xff]
        %v303 = vld [vmem:[%s278 + $0xa8] sm:$0xff]
        %v304 = vld [vmem:[%s278 + $0xb0] sm:$0xff]
        %v305 = vld [vmem:[%s278 + $0xb8] sm:$0xff]
        %v306 = vld [vmem:[%s278 + $0xc0] sm:$0xff]
        %v307 = vld [vmem:[%s278 + $0xc8] sm:$0xff]
        %v308 = vld [vmem:[%s278 + $0xd0] sm:$0xff]
        %v309 = vld [vmem:[%s278 + $0xd8] sm:$0xff]
        %v310 = vld [vmem:[%s278 + $0xe0] sm:$0xff]
        %v311 = vld [vmem:[%s278 + $0xe8] sm:$0xff]
        %v312 = vld [vmem:[%s278 + $0xf0] sm:$0xff]
        %v313 = vld [vmem:[%s278 + $0xf8] sm:$0xff]
        %v314 = vpack.c.bf16 %v283, %v282
        %v315 = vpack.c.bf16 %v285, %v284
        %v316 = vpack.c.bf16 %v287, %v286
        %v317 = vpack.c.bf16 %v289, %v288
        %v318 = vpack.c.bf16 %v291, %v290
        %v319 = vpack.c.bf16 %v293, %v292
        %v320 = vpack.c.bf16 %v295, %v294
        %v321 = vpack.c.bf16 %v297, %v296
        %v322 = vpack.c.bf16 %v299, %v298
        %v323 = vpack.c.bf16 %v301, %v300
        %v324 = vpack.c.bf16 %v303, %v302
        %v325 = vpack.c.bf16 %v305, %v304
        %v326 = vpack.c.bf16 %v307, %v306
        %v327 = vpack.c.bf16 %v309, %v308
        %v328 = vpack.c.bf16 %v311, %v310
        %v329 = vpack.c.bf16 %v313, %v312
        %v330 = vld [vmem:[%s1] sm:$0xf]
        %v331 = vld [vmem:[%s1 + $0x4] sm:$0xf]
        %v332 = vld [vmem:[%s1 + $0x8] sm:$0xf]
        %v333 = vld [vmem:[%s1 + $0xc] sm:$0xf]
        %v334 = vld [vmem:[%s1 + $0x10] sm:$0xf]
        %v335 = vld [vmem:[%s1 + $0x14] sm:$0xf]
        %v336 = vld [vmem:[%s1 + $0x18] sm:$0xf]
        %v337 = vld [vmem:[%s1 + $0x1c] sm:$0xf]
        %v338 = vld [vmem:[%s1 + $0x20] sm:$0xf]
        %v339 = vld [vmem:[%s1 + $0x24] sm:$0xf]
        %v340 = vld [vmem:[%s1 + $0x28] sm:$0xf]
        %v341 = vld [vmem:[%s1 + $0x2c] sm:$0xf]
        %v342 = vld [vmem:[%s1 + $0x30] sm:$0xf]
        %v343 = vld [vmem:[%s1 + $0x34] sm:$0xf]
        %v344 = vld [vmem:[%s1 + $0x38] sm:$0xf]
        %v345 = vld [vmem:[%s1 + $0x3c] sm:$0xf]
        %v346 = vld [vmem:[%s2] sm:$0xff]
        %v347 = vld [vmem:[%s2 + $0x8] sm:$0xff]
        %v348 = vld [vmem:[%s2 + $0x10] sm:$0xff]
        %v349 = vld [vmem:[%s2 + $0x18] sm:$0xff]
        %v350 = vld [vmem:[%s2 + $0x20] sm:$0xff]
        %v351 = vld [vmem:[%s2 + $0x28] sm:$0xff]
        %v352 = vld [vmem:[%s2 + $0x30] sm:$0xff]
        %v353 = vld [vmem:[%s2 + $0x38] sm:$0xff]
        %v354 = vld [vmem:[%s2 + $0x40] sm:$0xff]
        %v355 = vld [vmem:[%s2 + $0x48] sm:$0xff]
        %v356 = vld [vmem:[%s2 + $0x50] sm:$0xff]
        %v357 = vld [vmem:[%s2 + $0x58] sm:$0xff]
        %v358 = vld [vmem:[%s2 + $0x60] sm:$0xff]
        %v359 = vld [vmem:[%s2 + $0x68] sm:$0xff]
        %v360 = vld [vmem:[%s2 + $0x70] sm:$0xff]
        %v361 = vld [vmem:[%s2 + $0x78] sm:$0xff]
        %363 = vset.pattern.permute.xlu0 0
        %364 = vperm.xlu0 %363, %v346
        %v365 = vpop.permute.xlu0 %364
        %368 = vset.pattern.permute.xlu0 0
        %369 = vperm.xlu0 %368, %v347
        %v370 = vpop.permute.xlu0 %369
        %373 = vset.pattern.permute.xlu0 0
        %374 = vperm.xlu0 %373, %v348
        %v375 = vpop.permute.xlu0 %374
        %378 = vset.pattern.permute.xlu0 0
        %379 = vperm.xlu0 %378, %v349
        %v380 = vpop.permute.xlu0 %379
        %383 = vset.pattern.permute.xlu0 0
        %384 = vperm.xlu0 %383, %v350
        %v385 = vpop.permute.xlu0 %384
        %388 = vset.pattern.permute.xlu0 0
        %389 = vperm.xlu0 %388, %v351
        %v390 = vpop.permute.xlu0 %389
        %393 = vset.pattern.permute.xlu0 0
        %394 = vperm.xlu0 %393, %v352
        %v395 = vpop.permute.xlu0 %394
        %398 = vset.pattern.permute.xlu0 0
        %399 = vperm.xlu0 %398, %v353
        %v400 = vpop.permute.xlu0 %399
        %403 = vset.pattern.permute.xlu0 0
        %404 = vperm.xlu0 %403, %v354
        %v405 = vpop.permute.xlu0 %404
        %408 = vset.pattern.permute.xlu0 0
        %409 = vperm.xlu0 %408, %v355
        %v410 = vpop.permute.xlu0 %409
        %413 = vset.pattern.permute.xlu0 0
        %414 = vperm.xlu0 %413, %v356
        %v415 = vpop.permute.xlu0 %414
        %418 = vset.pattern.permute.xlu0 0
        %419 = vperm.xlu0 %418, %v357
        %v420 = vpop.permute.xlu0 %419
        %423 = vset.pattern.permute.xlu0 0
        %424 = vperm.xlu0 %423, %v358
        %v425 = vpop.permute.xlu0 %424
        %428 = vset.pattern.permute.xlu0 0
        %429 = vperm.xlu0 %428, %v359
        %v430 = vpop.permute.xlu0 %429
        %433 = vset.pattern.permute.xlu0 0
        %434 = vperm.xlu0 %433, %v360
        %v435 = vpop.permute.xlu0 %434
        %438 = vset.pattern.permute.xlu0 0
        %439 = vperm.xlu0 %438, %v361
        %v440 = vpop.permute.xlu0 %439
        %v458 = vunpack.c.l.b16 %v330
        %v459 = vunpack.c.l.b16 %v331
        %v460 = vunpack.c.l.b16 %v332
        %v461 = vunpack.c.l.b16 %v333
        %v462 = vunpack.c.l.b16 %v334
        %v463 = vunpack.c.l.b16 %v335
        %v464 = vunpack.c.l.b16 %v336
        %v465 = vunpack.c.l.b16 %v337
        %v466 = vunpack.c.l.b16 %v338
        %v467 = vunpack.c.l.b16 %v339
        %v468 = vunpack.c.l.b16 %v340
        %v469 = vunpack.c.l.b16 %v341
        %v470 = vunpack.c.l.b16 %v342
        %v471 = vunpack.c.l.b16 %v343
        %v472 = vunpack.c.l.b16 %v344
        %v473 = vunpack.c.l.b16 %v345
        %v474 = vpack.c.b16 %v459, %v458
        %v475 = vpack.c.b16 %v461, %v460
        %v476 = vpack.c.b16 %v463, %v462
        %v477 = vpack.c.b16 %v465, %v464
        %v478 = vpack.c.b16 %v467, %v466
        %v479 = vpack.c.b16 %v469, %v468
        %v480 = vpack.c.b16 %v471, %v470
        %v481 = vpack.c.b16 %v473, %v472
        %vm482 = vcmask 261120
        %v484 = vsel %vm482, %v474, 0
        %v487 = vsel %vm482, %v475, 0
        %v490 = vsel %vm482, %v476, 0
        %v493 = vsel %vm482, %v477, 0
        %v496 = vsel %vm482, %v478, 0
        %v499 = vsel %vm482, %v479, 0
        %v502 = vsel %vm482, %v480, 0
        %v505 = vsel %vm482, %v481, 0
        %v508 = vsel %vm482, %v314, 0
        %v511 = vsel %vm482, %v315, 0
        %v514 = vsel %vm482, %v316, 0
        %v517 = vsel %vm482, %v317, 0
        %v520 = vsel %vm482, %v318, 0
        %v523 = vsel %vm482, %v319, 0
        %v526 = vsel %vm482, %v320, 0
        %v529 = vsel %vm482, %v321, 0
        %v532 = vsel %vm482, %v322, 0
        %v535 = vsel %vm482, %v323, 0
        %v538 = vsel %vm482, %v324, 0
        %v541 = vsel %vm482, %v325, 0
        %v544 = vsel %vm482, %v326, 0
        %v547 = vsel %vm482, %v327, 0
        %v550 = vsel %vm482, %v328, 0
        %v553 = vsel %vm482, %v329, 0
        %555 = vmatprep.subr.bf16.mxu0 0
        %556 = vmatpush1.bf16.xpose.msra.mxu0 %v529
        %557 = vmatprep.subr.bf16.mxu0 0
        %558 = vmatpush1.bf16.xpose.msra.mxu0 %v526
        %559 = vmatprep.subr.bf16.mxu0 0
        %560 = vmatpush1.bf16.xpose.msra.mxu0 %v523
        %561 = vmatprep.subr.bf16.mxu0 0
        %562 = vmatpush1.bf16.xpose.msra.mxu0 %v520
        %563 = vmatprep.subr.bf16.mxu0 0
        %564 = vmatpush1.bf16.xpose.msra.mxu0 %v517
        %565 = vmatprep.subr.bf16.mxu0 0
        %566 = vmatpush1.bf16.xpose.msra.mxu0 %v514
        %567 = vmatprep.subr.bf16.mxu0 0
        %568 = vmatpush1.bf16.xpose.msra.mxu0 %v511
        %569 = vmatprep.subr.bf16.mxu0 0
        %570 = vmatpush1.bf16.xpose.msra.mxu0 %v508
        %571 = vmatprep.subr.bf16.mxu0 0
        %572 = vmatpush2.bf16.xpose.msra.mxu0 %v553
        %573 = vmatprep.subr.bf16.mxu0 0
        %574 = vmatpush2.bf16.xpose.msra.mxu0 %v550
        %575 = vmatprep.subr.bf16.mxu0 0
        %576 = vmatpush2.bf16.xpose.msra.mxu0 %v547
        %577 = vmatprep.subr.bf16.mxu0 0
        %578 = vmatpush2.bf16.xpose.msra.mxu0 %v544
        %579 = vmatprep.subr.bf16.mxu0 0
        %580 = vmatpush2.bf16.xpose.msra.mxu0 %v541
        %581 = vmatprep.subr.bf16.mxu0 0
        %582 = vmatpush2.bf16.xpose.msra.mxu0 %v538
        %583 = vmatprep.subr.bf16.mxu0 0
        %584 = vmatpush2.bf16.xpose.msra.mxu0 %v535
        %585 = vmatprep.subr.bf16.mxu0 0
        %586 = vmatpush2.bf16.xpose.msra.mxu0 %v532
        %587 = vmatprep.mubr.bf16.mxu0 0
        %588 = vmatmul.mubr.bf16.gmra.mxu0 %v484
        %v589 = vpop.f32.mrf.mxu0
        %v590 = vadd.f32 %v365, %v589
        %v591 = vpop.f32.mrf.mxu0
        %v592 = vadd.f32 %v365, %v591
        %v593 = vpop.f32.mrf.mxu0
        %v594 = vadd.f32 %v370, %v593
        %v595 = vpop.f32.mrf.mxu0
        %v596 = vadd.f32 %v370, %v595
        %597 = vmatprep.mubr.bf16.mxu0 0
        %598 = vmatmul.mubr.bf16.gmra.mxu0 %v487
        %v599 = vpop.f32.mrf.mxu0
        %v600 = vadd.f32 %v375, %v599
        %v601 = vpop.f32.mrf.mxu0
        %v602 = vadd.f32 %v375, %v601
        %v603 = vpop.f32.mrf.mxu0
        %v604 = vadd.f32 %v380, %v603
        %v605 = vpop.f32.mrf.mxu0
        %v606 = vadd.f32 %v380, %v605
        %607 = vmatprep.mubr.bf16.mxu0 0
        %608 = vmatmul.mubr.bf16.gmra.mxu0 %v490
        %v609 = vpop.f32.mrf.mxu0
        %v610 = vadd.f32 %v385, %v609
        %v611 = vpop.f32.mrf.mxu0
        %v612 = vadd.f32 %v385, %v611
        %v613 = vpop.f32.mrf.mxu0
        %v614 = vadd.f32 %v390, %v613
        %v615 = vpop.f32.mrf.mxu0
        %v616 = vadd.f32 %v390, %v615
        %617 = vmatprep.mubr.bf16.mxu0 0
        %618 = vmatmul.mubr.bf16.gmra.mxu0 %v493
        %v619 = vpop.f32.mrf.mxu0
        %v620 = vadd.f32 %v395, %v619
        %v621 = vpop.f32.mrf.mxu0
        %v622 = vadd.f32 %v395, %v621
        %v623 = vpop.f32.mrf.mxu0
        %v624 = vadd.f32 %v400, %v623
        %v625 = vpop.f32.mrf.mxu0
        %v626 = vadd.f32 %v400, %v625
        %627 = vmatprep.mubr.bf16.mxu0 0
        %628 = vmatmul.mubr.bf16.gmra.mxu0 %v496
        %v629 = vpop.f32.mrf.mxu0
        %v630 = vadd.f32 %v405, %v629
        %v631 = vpop.f32.mrf.mxu0
        %v632 = vadd.f32 %v405, %v631
        %v633 = vpop.f32.mrf.mxu0
        %v634 = vadd.f32 %v410, %v633
        %v635 = vpop.f32.mrf.mxu0
        %v636 = vadd.f32 %v410, %v635
        %637 = vmatprep.mubr.bf16.mxu0 0
        %638 = vmatmul.mubr.bf16.gmra.mxu0 %v499
        %v639 = vpop.f32.mrf.mxu0
        %v640 = vadd.f32 %v415, %v639
        %v641 = vpop.f32.mrf.mxu0
        %v642 = vadd.f32 %v415, %v641
        %v643 = vpop.f32.mrf.mxu0
        %v644 = vadd.f32 %v420, %v643
        %v645 = vpop.f32.mrf.mxu0
        %v646 = vadd.f32 %v420, %v645
        %647 = vmatprep.mubr.bf16.mxu0 0
        %648 = vmatmul.mubr.bf16.gmra.mxu0 %v502
        %v649 = vpop.f32.mrf.mxu0
        %v650 = vadd.f32 %v425, %v649
        %v651 = vpop.f32.mrf.mxu0
        %v652 = vadd.f32 %v425, %v651
        %v653 = vpop.f32.mrf.mxu0
        %v654 = vadd.f32 %v430, %v653
        %v655 = vpop.f32.mrf.mxu0
        %v656 = vadd.f32 %v430, %v655
        %657 = vmatprep.mubr.bf16.mxu0 0
        %658 = vmatmul.mubr.bf16.gmra.mxu0 %v505
        %v659 = vpop.f32.mrf.mxu0
        %v660 = vadd.f32 %v435, %v659
        %v661 = vpop.f32.mrf.mxu0
        %v662 = vadd.f32 %v435, %v661
        %v663 = vpop.f32.mrf.mxu0
        %v664 = vadd.f32 %v440, %v663
        %v665 = vpop.f32.mrf.mxu0
        %v666 = vadd.f32 %v440, %v665
        %667 = vdwg.mxu0
        %v668 = vmax.f32 %v590, 0.0
        %v669 = vmax.f32 %v592, 0.0
        %v670 = vmax.f32 %v594, 0.0
        %v671 = vmax.f32 %v596, 0.0
        %v672 = vmax.f32 %v600, 0.0
        %v673 = vmax.f32 %v602, 0.0
        %v674 = vmax.f32 %v604, 0.0
        %v675 = vmax.f32 %v606, 0.0
        %v676 = vmax.f32 %v610, 0.0
        %v677 = vmax.f32 %v612, 0.0
        %v678 = vmax.f32 %v614, 0.0
        %v679 = vmax.f32 %v616, 0.0
        %v680 = vmax.f32 %v620, 0.0
        %v681 = vmax.f32 %v622, 0.0
        %v682 = vmax.f32 %v624, 0.0
        %v683 = vmax.f32 %v626, 0.0
        %v684 = vmax.f32 %v630, 0.0
        %v685 = vmax.f32 %v632, 0.0
        %v686 = vmax.f32 %v634, 0.0
        %v687 = vmax.f32 %v636, 0.0
        %v688 = vmax.f32 %v640, 0.0
        %v689 = vmax.f32 %v642, 0.0
        %v690 = vmax.f32 %v644, 0.0
        %v691 = vmax.f32 %v646, 0.0
        %v692 = vmax.f32 %v650, 0.0
        %v693 = vmax.f32 %v652, 0.0
        %v694 = vmax.f32 %v654, 0.0
        %v695 = vmax.f32 %v656, 0.0
        %v696 = vmax.f32 %v660, 0.0
        %v697 = vmax.f32 %v662, 0.0
        %v698 = vmax.f32 %v664, 0.0
        %v699 = vmax.f32 %v666, 0.0
        %v700 = vld [vmem:[%s3] sm:$0xf]
        %v701 = vld [vmem:[%s3 + $0x4] sm:$0xf]
        %v702 = vld [vmem:[%s3 + $0x8] sm:$0xf]
        %v703 = vld [vmem:[%s3 + $0xc] sm:$0xf]
        %v704 = vld [vmem:[%s3 + $0x10] sm:$0xf]
        %v705 = vld [vmem:[%s3 + $0x14] sm:$0xf]
        %v706 = vld [vmem:[%s3 + $0x18] sm:$0xf]
        %v707 = vld [vmem:[%s3 + $0x1c] sm:$0xf]
        %v708 = vpack.c.bf16 %v670, %v668
        %v709 = vpack.c.bf16 %v671, %v669
        %v710 = vpack.c.bf16 %v674, %v672
        %v711 = vpack.c.bf16 %v675, %v673
        %v712 = vpack.c.bf16 %v678, %v676
        %v713 = vpack.c.bf16 %v679, %v677
        %v714 = vpack.c.bf16 %v682, %v680
        %v715 = vpack.c.bf16 %v683, %v681
        %v716 = vpack.c.bf16 %v686, %v684
        %v717 = vpack.c.bf16 %v687, %v685
        %v718 = vpack.c.bf16 %v690, %v688
        %v719 = vpack.c.bf16 %v691, %v689
        %v720 = vpack.c.bf16 %v694, %v692
        %v721 = vpack.c.bf16 %v695, %v693
        %v722 = vpack.c.bf16 %v698, %v696
        %v723 = vpack.c.bf16 %v699, %v697
        %v724 = vld [vmem:[%s4] sm:$0xff]
        %v725 = vld [vmem:[%s4 + $0x8] sm:$0xff]
        %v726 = vld [vmem:[%s4 + $0x10] sm:$0xff]
        %v727 = vld [vmem:[%s4 + $0x18] sm:$0xff]
        %v728 = vld [vmem:[%s4 + $0x20] sm:$0xff]
        %v729 = vld [vmem:[%s4 + $0x28] sm:$0xff]
        %v730 = vld [vmem:[%s4 + $0x30] sm:$0xff]
        %v731 = vld [vmem:[%s4 + $0x38] sm:$0xff]
        %733 = vset.pattern.permute.xlu0 0
        %734 = vperm.xlu0 %733, %v724
        %v735 = vpop.permute.xlu0 %734
        %738 = vset.pattern.permute.xlu0 0
        %739 = vperm.xlu0 %738, %v725
        %v740 = vpop.permute.xlu0 %739
        %743 = vset.pattern.permute.xlu0 0
        %744 = vperm.xlu0 %743, %v726
        %v745 = vpop.permute.xlu0 %744
        %748 = vset.pattern.permute.xlu0 0
        %749 = vperm.xlu0 %748, %v727
        %v750 = vpop.permute.xlu0 %749
        %753 = vset.pattern.permute.xlu0 0
        %754 = vperm.xlu0 %753, %v728
        %v755 = vpop.permute.xlu0 %754
        %758 = vset.pattern.permute.xlu0 0
        %759 = vperm.xlu0 %758, %v729
        %v760 = vpop.permute.xlu0 %759
        %763 = vset.pattern.permute.xlu0 0
        %764 = vperm.xlu0 %763, %v730
        %v765 = vpop.permute.xlu0 %764
        %768 = vset.pattern.permute.xlu0 0
        %769 = vperm.xlu0 %768, %v731
        %v770 = vpop.permute.xlu0 %769
        %v780 = vunpack.c.l.b16 %v700
        %v781 = vunpack.c.l.b16 %v701
        %v782 = vunpack.c.l.b16 %v702
        %v783 = vunpack.c.l.b16 %v703
        %v784 = vunpack.c.l.b16 %v704
        %v785 = vunpack.c.l.b16 %v705
        %v786 = vunpack.c.l.b16 %v706
        %v787 = vunpack.c.l.b16 %v707
        %v788 = vpack.c.b16 %v781, %v780
        %v789 = vpack.c.b16 %v783, %v782
        %v790 = vpack.c.b16 %v785, %v784
        %v791 = vpack.c.b16 %v787, %v786
        %796 = vmatprep.subr.bf16.mxu0 %v723
        %797 = vmatpush1.bf16.msra.mxu0 %v722
        %798 = vmatprep.subr.bf16.mxu0 %v721
        %799 = vmatpush1.bf16.msra.mxu0 %v720
        %800 = vmatprep.subr.bf16.mxu0 %v719
        %801 = vmatpush1.bf16.msra.mxu0 %v718
        %802 = vmatprep.subr.bf16.mxu0 %v717
        %803 = vmatpush1.bf16.msra.mxu0 %v716
        %804 = vmatprep.subr.bf16.mxu0 %v715
        %805 = vmatpush1.bf16.msra.mxu0 %v714
        %806 = vmatprep.subr.bf16.mxu0 %v713
        %807 = vmatpush1.bf16.msra.mxu0 %v712
        %808 = vmatprep.subr.bf16.mxu0 %v711
        %809 = vmatpush1.bf16.msra.mxu0 %v710
        %810 = vmatprep.subr.bf16.mxu0 %v709
        %811 = vmatpush1.bf16.msra.mxu0 %v708
        %812 = vmatprep.subr.bf16.mxu0 0
        %813 = vmatpush2.bf16.msra.mxu0 0
        %814 = vmatprep.subr.bf16.mxu0 0
        %815 = vmatpush2.bf16.msra.mxu0 0
        %816 = vmatprep.subr.bf16.mxu0 0
        %817 = vmatpush2.bf16.msra.mxu0 0
        %818 = vmatprep.subr.bf16.mxu0 0
        %819 = vmatpush2.bf16.msra.mxu0 0
        %820 = vmatprep.subr.bf16.mxu0 0
        %821 = vmatpush2.bf16.msra.mxu0 0
        %822 = vmatprep.subr.bf16.mxu0 0
        %823 = vmatpush2.bf16.msra.mxu0 0
        %824 = vmatprep.subr.bf16.mxu0 0
        %825 = vmatpush2.bf16.msra.mxu0 0
        %826 = vmatprep.subr.bf16.mxu0 0
        %827 = vmatpush2.bf16.msra.mxu0 0
        %828 = vmatprep.mubr.bf16.mxu0 0
        %829 = vmatmul.mubr.bf16.gmra.mxu0 %v788
        %v830 = vpop.f32.mrf.mxu0
        %v831 = vadd.f32 %v735, %v830
        %v832 = vpop.f32.mrf.mxu0
        %v833 = vadd.f32 %v735, %v832
        %v834 = vpop.f32.mrf.mxu0
        %v835 = vadd.f32 %v740, %v834
        %v836 = vpop.f32.mrf.mxu0
        %v837 = vadd.f32 %v740, %v836
        %838 = vmatprep.mubr.bf16.mxu0 0
        %839 = vmatmul.mubr.bf16.gmra.mxu0 %v789
        %v840 = vpop.f32.mrf.mxu0
        %v841 = vadd.f32 %v745, %v840
        %v842 = vpop.f32.mrf.mxu0
        %v843 = vadd.f32 %v745, %v842
        %v844 = vpop.f32.mrf.mxu0
        %v845 = vadd.f32 %v750, %v844
        %v846 = vpop.f32.mrf.mxu0
        %v847 = vadd.f32 %v750, %v846
        %848 = vmatprep.mubr.bf16.mxu0 0
        %849 = vmatmul.mubr.bf16.gmra.mxu0 %v790
        %v850 = vpop.f32.mrf.mxu0
        %v851 = vadd.f32 %v755, %v850
        %v852 = vpop.f32.mrf.mxu0
        %v853 = vadd.f32 %v755, %v852
        %v854 = vpop.f32.mrf.mxu0
        %v855 = vadd.f32 %v760, %v854
        %v856 = vpop.f32.mrf.mxu0
        %v857 = vadd.f32 %v760, %v856
        %858 = vmatprep.mubr.bf16.mxu0 0
        %859 = vmatmul.mubr.bf16.gmra.mxu0 %v791
        %v860 = vpop.f32.mrf.mxu0
        %v861 = vadd.f32 %v765, %v860
        %v862 = vpop.f32.mrf.mxu0
        %v863 = vadd.f32 %v765, %v862
        %v864 = vpop.f32.mrf.mxu0
        %v865 = vadd.f32 %v770, %v864
        %v866 = vpop.f32.mrf.mxu0
        %v867 = vadd.f32 %v770, %v866
        %868 = vdwg.mxu0
        %v869 = vmax.f32 %v831, 0.0
        %v870 = vmax.f32 %v833, 0.0
        %v871 = vmax.f32 %v835, 0.0
        %v872 = vmax.f32 %v837, 0.0
        %v873 = vmax.f32 %v841, 0.0
        %v874 = vmax.f32 %v843, 0.0
        %v875 = vmax.f32 %v845, 0.0
        %v876 = vmax.f32 %v847, 0.0
        %v877 = vmax.f32 %v851, 0.0
        %v878 = vmax.f32 %v853, 0.0
        %v879 = vmax.f32 %v855, 0.0
        %v880 = vmax.f32 %v857, 0.0
        %v881 = vmax.f32 %v861, 0.0
        %v882 = vmax.f32 %v863, 0.0
        %v883 = vmax.f32 %v865, 0.0
        %v884 = vmax.f32 %v867, 0.0
        %v885 = vld [vmem:[%s5] sm:$0xff]
        %v886 = vld [vmem:[%s5 + $0x8] sm:$0xff]
        %v887 = vld [vmem:[%s5 + $0x10] sm:$0xff]
        %v888 = vld [vmem:[%s5 + $0x18] sm:$0xff]
        %v889 = vld [vmem:[%s5 + $0x20] sm:$0xff]
        %v890 = vld [vmem:[%s5 + $0x28] sm:$0xff]
        %v891 = vld [vmem:[%s5 + $0x30] sm:$0xff]
        %v892 = vld [vmem:[%s5 + $0x38] sm:$0xff]
        %894 = vset.pattern.permute.xlu0 0
        %895 = vperm.xlu0 %894, %v885
        %v896 = vpop.permute.xlu0 %895
        %899 = vset.pattern.permute.xlu0 0
        %900 = vperm.xlu0 %899, %v886
        %v901 = vpop.permute.xlu0 %900
        %904 = vset.pattern.permute.xlu0 0
        %905 = vperm.xlu0 %904, %v887
        %v906 = vpop.permute.xlu0 %905
        %909 = vset.pattern.permute.xlu0 0
        %910 = vperm.xlu0 %909, %v888
        %v911 = vpop.permute.xlu0 %910
        %914 = vset.pattern.permute.xlu0 0
        %915 = vperm.xlu0 %914, %v889
        %v916 = vpop.permute.xlu0 %915
        %919 = vset.pattern.permute.xlu0 0
        %920 = vperm.xlu0 %919, %v890
        %v921 = vpop.permute.xlu0 %920
        %924 = vset.pattern.permute.xlu0 0
        %925 = vperm.xlu0 %924, %v891
        %v926 = vpop.permute.xlu0 %925
        %929 = vset.pattern.permute.xlu0 0
        %930 = vperm.xlu0 %929, %v892
        %v931 = vpop.permute.xlu0 %930
        %v933 = vmul.f32 %v869, %v896
        %v934 = vmul.f32 %v870, %v896
        %v935 = vmul.f32 %v871, %v901
        %v936 = vmul.f32 %v872, %v901
        %v937 = vmul.f32 %v873, %v906
        %v938 = vmul.f32 %v874, %v906
        %v939 = vmul.f32 %v875, %v911
        %v940 = vmul.f32 %v876, %v911
        %v941 = vmul.f32 %v877, %v916
        %v942 = vmul.f32 %v878, %v916
        %v943 = vmul.f32 %v879, %v921
        %v944 = vmul.f32 %v880, %v921
        %v945 = vmul.f32 %v881, %v926
        %v946 = vmul.f32 %v882, %v926
        %v947 = vmul.f32 %v883, %v931
        %v948 = vmul.f32 %v884, %v931
        %v949 = vadd.f32 %v933, %v935
        %v950 = vadd.f32 %v949, %v937
        %v951 = vadd.f32 %v950, %v939
        %v952 = vadd.f32 %v951, %v941
        %v953 = vadd.f32 %v952, %v943
        %v954 = vadd.f32 %v953, %v945
        %v955 = vadd.f32 %v954, %v947
        %v956 = vrot.slane %v955, 4
        %v957 = vadd.f32 %v955, %v956
        %v958 = vrot.slane %v957, 2
        %v959 = vadd.f32 %v957, %v958
        %v960 = vrot.slane %v959, 1
        %v961 = vadd.f32 %v959, %v960
        %v962 = vadd.f32 %v934, %v936
        %v963 = vadd.f32 %v962, %v938
        %v964 = vadd.f32 %v963, %v940
        %v965 = vadd.f32 %v964, %v942
        %v966 = vadd.f32 %v965, %v944
        %v967 = vadd.f32 %v966, %v946
        %v968 = vadd.f32 %v967, %v948
        %v969 = vrot.slane %v968, 4
        %v970 = vadd.f32 %v968, %v969
        %v971 = vrot.slane %v970, 2
        %v972 = vadd.f32 %v970, %v971
        %v973 = vrot.slane %v972, 1
        %v974 = vadd.f32 %v972, %v973
        %s975 = sld [smem:[#allocation2]]
        %v976 = vstv %s975
        %v977 = vadd.f32 %v961, %v976
        %v978 = vadd.f32 %v974, %v976
        %v979 = vxor.u32 %v977, 2147483648
        %v980 = vxor.u32 %v978, 2147483648
        %v981 = vmul.f32 %v979, 1.442695
        %v982 = vpow.pop %v981
        %v983 = vmul.f32 %v980, 1.442695
        %v984 = vpow.pop %v983
        %v985 = vadd.f32 %v982, 1.0
        %v986 = vadd.f32 %v984, 1.0
        %v987 = vrcp.pop %v985
        %v988 = vmul.f32 1.0, %v987
        %v989 = vrcp.pop %v986
        %v990 = vmul.f32 1.0, %v989
        %v993 = vcombine.low %v988, %v990
        %v995 = vunpack.c.l.s4 1966171168
        %v996 = vunpack.c.0.s8 %v995
        %v997 = vlaneseq
        %v998 = vshrl.u32 %v997, 7
        %v999 = vsub.s32 %v996, %v998
        %v1000 = vrot.slane %v993, %v999
        %v1002 = vunpack.c.l.s4 1966171168
        %v1003 = vunpack.c.0.s8 %v1002
        %v1004 = vlaneseq
        %v1005 = vshrl.u32 %v1004, 7
        %v1006 = vsub.s32 %v1003, %v1005
        %v1007 = vrot.slane %v1000, %v1006
        %v1009 = vlaneseq
        %vm1010 = vcmp.ge.s32.totalorder %v1009, 0
        %vm1011 = vcmp.lt.s32.totalorder %v1009, 256
        %vm1012 = vmand %vm1010, %vm1011
        %1013 = vst.msk [vmem:[%s273] sm:$0x3] %vm1012, %v1007
        %s1014 = sand.u32 %s182, 1
        %s1015 = scalar_lea.sflag [#allocation4], %s1014
        %s1016 = sand.u32 %s182, 1
        %s1017 = smul.addr %s1016, 2
        %s1018 = scalar_lea.vmem [#allocation3], %s1017
        // Predicated region
        $region49: #{_lambda_.1} parent=47 // pred_check
          %p1019 = pneg %p192
        $region50: #{_lambda_.1} parent=47 // pred_check_branch
          %1021 = sbr.rel (%p1019) target = $region52
        $region51: #{_lambda_.1} parent=47 // pred_region
          %s1022 = smul.u32 2, %s22
          %s1024 = ssub.s32 32, 32
          %1025 = vsyncadd %s1015, %s1024
          %s1026 = smul.addr %s1022, 16
          %s1027 = scalar_lea.hbm %s7, %s1026
          %s1029 = sshll.u32 %s1018, 4
          %s1030 = int_to_ptr.vmem [resolvable:$true] %s1029
          %1032 = dma.vmem_to_hbm [thread:$0]  %s1030, 32, %s1027, %s1015
        $region52: #{_lambda_.1} parent=47 // pred_fallthru
          _
      $region48: #{_lambda_.1} parent=5 // pred_fallthru
        _
      %p1033 = scmp.le.s32.totalorder 2, %s17
      // Predicated region
      $region53: #{_lambda_.1} parent=5 // pred_check
        %p1034 = pneg %p1033
      $region54: #{_lambda_.1} parent=5 // pred_check_branch
        %1036 = sbr.rel (%p1034) target = $region56
      $region55: #{_lambda_.1} parent=5 // pred_region
        %s1037 = ssub.s32 %s17, 2
        // Predicated region
        $region57: #{_lambda_.1} parent=55 // pred_check
          %p1038 = pneg %p198
        $region58: #{_lambda_.1} parent=55 // pred_check_branch
          %1040 = sbr.rel (%p1038) target = $region60
        $region59: #{_lambda_.1} parent=55 // pred_region
          %s1041 = sand.u32 %s183, 1
          %s1042 = scalar_lea.sflag [#allocation4], %s1041
          %s1043 = sand.u32 %s183, 1
          %s1044 = smul.addr %s1043, 2
          %s1045 = scalar_lea.vmem [#allocation3], %s1044
          %1046 = dma.done %s1042, 32
        $region60: #{_lambda_.1} parent=55 // pred_fallthru
          _
      $region56: #{_lambda_.1} parent=5 // pred_fallthru
        _
    $region6: #{_lambda_.1} parent=1 // loop_footer
      %s21 = sadd.s32 1, %s17
    $region7: #{_lambda_.1} parent=1 // loop_footer_branch
      %16 = sbr.rel target = $region3
    $region8: #{_lambda_.1} parent=1 // loop_exit
      _
    %1047 = vsyncpa [#allocation4], 1
    %s1048 = scalar_lea.sflag [#allocation4], 1
    %1049 = vsyncpa %s1048, 1

</llo_original>
